<compile_context>
chip_gen: v7x
topology: tpu7x:2x2x1
jax: 0.10.0
libtpu: 0.0.40
codegen_flags: <defaults>
</compile_context>

<pallas_src>
import functools
import math

import jax
import jax.numpy as jnp
from jax.experimental import pallas as pl
from jax.experimental.pallas import tpu as pltpu


# Explicit scoped-VMEM limit: above v5e's 16 MiB / v6e-v7x's 32 MiB defaults, but well
# under every generation's physical VMEM (128 MiB v5e/v6e, 64 MiB v7x).
_VMEM_LIMIT_BYTES = 48 << 20
# Per-grid-step footprint budget used to size tiles:
#   2x double-buffered input + 2x double-buffered output (native dtype) + ~3x f32 temps.
_VMEM_BUDGET_BYTES = 24 << 20
# Only force a second grid step (for v7x megacore) if each half still streams >= this.
_MIN_SPLIT_BYTES = 512 << 10


def _pick_tile(num, unit_elems, itemsize, align=1):
    """Tile size along an independent row/sample axis.

    `unit_elems` = elements per row/sample; footprint per unit is counted as
    2x in + 2x out (native dtype, double-buffered) + ~3x f32 temporaries.
    Returns either a multiple of `align` (< num, ragged tail masked by the cdiv grid)
    or `num` itself (full axis -> always a legal block dim).
    """
    per_unit_vmem = unit_elems * (4 * itemsize + 3 * 4)
    tile = max(1, _VMEM_BUDGET_BYTES // per_unit_vmem)
    if tile < num:
        tile = max(align, (tile // align) * align)
        return tile if tile < num else num
    # Whole axis fits in one step; split in two for v7x's second TensorCore when each
    # half still keeps the DMA large enough to hide the ~0.35 us per-step overhead.
    half = -(-num // 2)
    half = ((half + align - 1) // align) * align
    if half < num and half * unit_elems * itemsize >= _MIN_SPLIT_BYTES:
        return half
    return num


# ---------------------------------------------------------------------------
# channels_last: normalize over the trailing C axis of a (rows, C) tile.
# ---------------------------------------------------------------------------
def _ln_channels_last_kernel(x_ref, w_ref, b_ref, o_ref, *, eps):
    x = x_ref[...].astype(jnp.float32)                    # (Tm, C), C on lanes
    mean = jnp.mean(x, axis=-1, keepdims=True)            # (Tm, 1)
    xc = x - mean
    var = jnp.mean(xc * xc, axis=-1, keepdims=True)       # (Tm, 1)
    rstd = jax.lax.rsqrt(var + eps)                        # EUP slot
    w = w_ref[...].astype(jnp.float32)                     # (1, C)
    b = b_ref[...].astype(jnp.float32)                     # (1, C)
    o_ref[...] = ((xc * rstd) * w + b).astype(o_ref.dtype)


def layer_norm_channels_last(x, weight, bias, eps=1e-6):
    """x: (..., C); weight, bias: (C,)."""
    orig_shape = x.shape
    C = orig_shape[-1]
    M = math.prod(orig_shape[:-1]) if len(orig_shape) > 1 else 1
    x2 = x.reshape(M, C)                                   # free: C already last
    w2 = weight.reshape(1, C)
    b2 = bias.reshape(1, C)

    tm = _pick_tile(M, C, x.dtype.itemsize, align=8)       # multiple of 8 or == M
    grid = (pl.cdiv(M, tm),)                               # ragged tail masked by Pallas

    out = pl.pallas_call(
        functools.partial(_ln_channels_last_kernel, eps=float(eps)),
        out_shape=jax.ShapeDtypeStruct((M, C), x.dtype),
        grid=grid,
        in_specs=[
            pl.BlockSpec((tm, C), lambda i: (i, 0)),
            pl.BlockSpec((1, C), lambda i: (0, 0)),         # weight stays resident
            pl.BlockSpec((1, C), lambda i: (0, 0)),         # bias stays resident
        ],
        out_specs=pl.BlockSpec((tm, C), lambda i: (i, 0)),
        compiler_params=pltpu.CompilerParams(
            dimension_semantics=("parallel",),
            vmem_limit_bytes=_VMEM_LIMIT_BYTES,
        ),
    )(x2, w2, b2)
    return out.reshape(orig_shape)


# ---------------------------------------------------------------------------
# channels_first: wrapper flattens (N, C, H, W) -> (N, C, H*W) so the long H*W axis
# sits on the 128 lanes (lane-dense loads/stores); reduction over C is a cheap
# cross-sublane accumulate.  Several samples are batched per block when small.
# ---------------------------------------------------------------------------
def _ln_channels_first_kernel(x_ref, w_ref, b_ref, o_ref, *, eps):
    x = x_ref[...].astype(jnp.float32)                    # (Nb, C, HW), HW on lanes
    mean = jnp.mean(x, axis=1, keepdims=True)             # (Nb, 1, HW)
    xc = x - mean
    var = jnp.mean(xc * xc, axis=1, keepdims=True)        # (Nb, 1, HW)
    rstd = jax.lax.rsqrt(var + eps)                        # EUP slot
    w = w_ref[...].astype(jnp.float32)                     # (1, C, 1)
    b = b_ref[...].astype(jnp.float32)                     # (1, C, 1)
    o_ref[...] = ((xc * rstd) * w + b).astype(o_ref.dtype)


def layer_norm_channels_first(x, weight, bias, eps=1e-6):
    """x: (N, C, H, W); weight, bias: (C,)."""
    N, C, H, W = x.shape
    HW = H * W
    x3 = x.reshape(N, C, HW)                               # free: H, W are contiguous
    w3 = weight.reshape(1, C, 1)
    b3 = bias.reshape(1, C, 1)

    nb = _pick_tile(N, C * HW, x.dtype.itemsize, align=1)  # samples per block
    grid = (pl.cdiv(N, nb),)                               # ragged tail masked by Pallas

    out = pl.pallas_call(
        functools.partial(_ln_channels_first_kernel, eps=float(eps)),
        out_shape=jax.ShapeDtypeStruct((N, C, HW), x.dtype),
        grid=grid,
        in_specs=[
            pl.BlockSpec((nb, C, HW), lambda i: (i, 0, 0)),
            pl.BlockSpec((1, C, 1), lambda i: (0, 0, 0)),
            pl.BlockSpec((1, C, 1), lambda i: (0, 0, 0)),
        ],
        out_specs=pl.BlockSpec((nb, C, HW), lambda i: (i, 0, 0)),
        compiler_params=pltpu.CompilerParams(
            dimension_semantics=("parallel",),
            vmem_limit_bytes=_VMEM_LIMIT_BYTES,
        ),
    )(x3, w3, b3)
    return out.reshape(N, C, H, W)


def layer_norm(x, weight, bias, eps=1e-6, data_format="channels_last"):
    if data_format == "channels_last":
        return layer_norm_channels_last(x, weight, bias, eps)
    elif data_format == "channels_first":
        return layer_norm_channels_first(x, weight, bias, eps)
    raise NotImplementedError(data_format)


# ---------------------------------------------------------------------------
# Pure-JAX reference (mirrors the PyTorch module).
# ---------------------------------------------------------------------------
def layer_norm_ref(x, weight, bias, eps, data_format):
    xf = x.astype(jnp.float32)
    if data_format == "channels_last":
        u = jnp.mean(xf, axis=-1, keepdims=True)
        s = jnp.mean((xf - u) ** 2, axis=-1, keepdims=True)
        xh = (xf - u) / jnp.sqrt(s + eps)
        return (xh * weight + bias).astype(x.dtype)
    else:
        u = jnp.mean(xf, axis=1, keepdims=True)
        s = jnp.mean((xf - u) ** 2, axis=1, keepdims=True)
        xh = (xf - u) / jnp.sqrt(s + eps)
        return (weight[:, None, None] * xh + bias[:, None, None]).astype(x.dtype)


if __name__ == "__main__":
    key = jax.random.PRNGKey(0)
    k1, k2, k3, k4, k5, k6 = jax.random.split(key, 6)
    eps = 1e-6

    # --- channels_first: (N, C, H, W), normalized over C ---
    N, C, H, W = 2, 4, 16, 16
    x_cf = jax.random.normal(k1, (N, C, H, W), dtype=jnp.float32)
    w_cf = 1.0 + 0.1 * jax.random.normal(k2, (C,), dtype=jnp.float32)
    b_cf = 0.1 * jax.random.normal(k3, (C,), dtype=jnp.float32)

    out_cf = jax.block_until_ready(
        layer_norm(x_cf, w_cf, b_cf, eps, data_format="channels_first"))
    ref_cf = layer_norm_ref(x_cf, w_cf, b_cf, eps, "channels_first")
    assert out_cf.shape == x_cf.shape and out_cf.dtype == x_cf.dtype
    assert jnp.allclose(out_cf, ref_cf, atol=1e-5, rtol=1e-5)

    # --- channels_last: (N, H, W, C), normalized over trailing C ---
    Cl = 32
    x_cl = jax.random.normal(k4, (N, H, W, Cl), dtype=jnp.float32)
    w_cl = 1.0 + 0.1 * jax.random.normal(k5, (Cl,), dtype=jnp.float32)
    b_cl = 0.1 * jax.random.normal(k6, (Cl,), dtype=jnp.float32)

    out_cl = jax.block_until_ready(
        layer_norm(x_cl, w_cl, b_cl, eps, data_format="channels_last"))
    ref_cl = layer_norm_ref(x_cl, w_cl, b_cl, eps, "channels_last")
    assert out_cl.shape == x_cl.shape and out_cl.dtype == x_cl.dtype
    assert jnp.allclose(out_cl, ref_cl, atol=1e-5, rtol=1e-5)

    print("KERNEL_OK")
</pallas_src>

<mosaic_0001>
module attributes {stable_mosaic.version = 11 : i64} {
  func.func @_ln_channels_first_kernel(%arg0: i32, %arg1: memref<2x4x256xf32, #tpu.memory_space<vmem>>, %arg2: memref<1x4x1xf32, #tpu.memory_space<vmem>>, %arg3: memref<1x4x1xf32, #tpu.memory_space<vmem>>, %arg4: memref<2x4x256xf32, #tpu.memory_space<vmem>>) attributes {dimension_semantics = [#tpu.dimension_semantics<parallel>], iteration_bounds = array<i64: 1>, scalar_prefetch = 0 : i64, scratch_operands = 0 : i64, tpu.core_type = #tpu.core_type<tc>, window_params = [{transform_indices = @transform_0, window_bounds = array<i64: 2, 4, 256>}, {pipeline_mode = #tpu.pipeline_mode<synchronous>, transform_indices = @transform_1, window_bounds = array<i64: 1, 4, 1>}, {pipeline_mode = #tpu.pipeline_mode<synchronous>, transform_indices = @transform_2, window_bounds = array<i64: 1, 4, 1>}, {transform_indices = @transform_3, window_bounds = array<i64: 2, 4, 256>}]} {
    %c0 = arith.constant 0 : index
    %c0_0 = arith.constant 0 : index
    %c0_1 = arith.constant 0 : index
    %0 = vector.load %arg1[%c0, %c0_0, %c0_1] : memref<2x4x256xf32, #tpu.memory_space<vmem>>, vector<2x4x256xf32>
    %cst = arith.constant dense<0.000000e+00> : vector<2x256xf32>
    %1 = vector.multi_reduction <add>, %0, %cst [1] : vector<2x4x256xf32> to vector<2x256xf32>
    %2 = vector.shape_cast %1 : vector<2x256xf32> to vector<2x1x256xf32>
    %cst_2 = arith.constant 4.000000e+00 : f32
    %3 = vector.broadcast %cst_2 : f32 to vector<2x1x256xf32>
    %4 = arith.divf %2, %3 : vector<2x1x256xf32>
    %5 = vector.broadcast %4 : vector<2x1x256xf32> to vector<2x4x256xf32>
    %6 = arith.subf %0, %5 : vector<2x4x256xf32>
    %7 = arith.mulf %6, %6 : vector<2x4x256xf32>
    %cst_3 = arith.constant dense<0.000000e+00> : vector<2x256xf32>
    %8 = vector.multi_reduction <add>, %7, %cst_3 [1] : vector<2x4x256xf32> to vector<2x256xf32>
    %9 = vector.shape_cast %8 : vector<2x256xf32> to vector<2x1x256xf32>
    %cst_4 = arith.constant 4.000000e+00 : f32
    %10 = vector.broadcast %cst_4 : f32 to vector<2x1x256xf32>
    %11 = arith.divf %9, %10 : vector<2x1x256xf32>
    %cst_5 = arith.constant 9.99999997E-7 : f32
    %12 = vector.broadcast %cst_5 : f32 to vector<2x1x256xf32>
    %13 = arith.addf %11, %12 : vector<2x1x256xf32>
    %14 = math.rsqrt %13 : vector<2x1x256xf32>
    %c0_6 = arith.constant 0 : index
    %c0_7 = arith.constant 0 : index
    %c0_8 = arith.constant 0 : index
    %15 = vector.load %arg2[%c0_6, %c0_7, %c0_8] : memref<1x4x1xf32, #tpu.memory_space<vmem>>, vector<1x4x1xf32>
    %c0_9 = arith.constant 0 : index
    %c0_10 = arith.constant 0 : index
    %c0_11 = arith.constant 0 : index
    %16 = vector.load %arg3[%c0_9, %c0_10, %c0_11] : memref<1x4x1xf32, #tpu.memory_space<vmem>>, vector<1x4x1xf32>
    %17 = vector.broadcast %14 : vector<2x1x256xf32> to vector<2x4x256xf32>
    %18 = arith.mulf %6, %17 : vector<2x4x256xf32>
    %19 = vector.broadcast %15 : vector<1x4x1xf32> to vector<2x4x256xf32>
    %20 = arith.mulf %18, %19 : vector<2x4x256xf32>
    %21 = vector.broadcast %16 : vector<1x4x1xf32> to vector<2x4x256xf32>
    %22 = arith.addf %20, %21 : vector<2x4x256xf32>
    %c0_12 = arith.constant 0 : index
    %c0_13 = arith.constant 0 : index
    %c0_14 = arith.constant 0 : index
    %23 = vector.load %arg4[%c0_12, %c0_13, %c0_14] : memref<2x4x256xf32, #tpu.memory_space<vmem>>, vector<2x4x256xf32>
    tpu.vector_store %arg4[%c0_12, %c0_13, %c0_14], %22 {strides = array<i32>} : memref<2x4x256xf32, #tpu.memory_space<vmem>>, vector<2x4x256xf32>,
    return
  }
  func.func @transform_0(%arg0: i32) -> (i32, i32, i32) {
    %c0_i32 = arith.constant 0 : i32
    %c0_i32_0 = arith.constant 0 : i32
    %c0_i32_1 = arith.constant 0 : i32
    return %arg0, %c0_i32, %c0_i32_0 : i32, i32, i32
  }
  func.func @transform_1(%arg0: i32) -> (i32, i32, i32) {
    %c0_i32 = arith.constant 0 : i32
    %c0_i32_0 = arith.constant 0 : i32
    %c0_i32_1 = arith.constant 0 : i32
    %c0_i32_2 = arith.constant 0 : i32
    return %c0_i32, %c0_i32_0, %c0_i32_1 : i32, i32, i32
  }
  func.func @transform_2(%arg0: i32) -> (i32, i32, i32) {
    %c0_i32 = arith.constant 0 : i32
    %c0_i32_0 = arith.constant 0 : i32
    %c0_i32_1 = arith.constant 0 : i32
    %c0_i32_2 = arith.constant 0 : i32
    return %c0_i32, %c0_i32_0, %c0_i32_1 : i32, i32, i32
  }
  func.func @transform_3(%arg0: i32) -> (i32, i32, i32) {
    %c0_i32 = arith.constant 0 : i32
    %c0_i32_0 = arith.constant 0 : i32
    %c0_i32_1 = arith.constant 0 : i32
    return %arg0, %c0_i32, %c0_i32_0 : i32, i32, i32
  }
}

</mosaic_0001>

<llo_original>
// kernel: tpu_custom_call.1
$region0: #{tpu_custom_call.1}
  #allocation0 [shape = 'u32[]', space=smem, size = 0x4, offset = 0x4, fixed_abs, tag = 'smem constant byte address 0x4 - core index']
  #allocation1 [shape = 'u32[144,128]{1,0:T(1,128)}', space=vmem, size = 0x12000, scoped, tag = 'internal scratch']
  %s0 = inlined_call_operand.hbm [shape: f32[2,4,256], index: 0, kind: input, shape index: {}]
  %s1 = inlined_call_operand.vmem [shape: f32[1,4,1], index: 1, kind: input, shape index: {}]
  %s2 = inlined_call_operand.vmem [shape: f32[1,4,1], index: 2, kind: input, shape index: {}]
  %s3 = inlined_call_operand.hbm [shape: f32[2,4,256], index: 3, kind: output, shape index: {}]
  %s4 = sld [smem:[#allocation0]]
  $region26: #{tpu_custom_call.1} parent=0
    _
  %s6 = ssub.s32 1, %s4
  %s7 = scalar_select 0, %s6, %s4
  $region1: #{tpu_custom_call.1} parent=0
    #allocation2 [shape = 'u8[8192]{0}', space=vmem, size = 0x2000, scoped, tag = 'input window, operand 0, single buffered']
    #allocation3 [shape = 's32[1]{0}', space=sflag, size = 0x4, scoped, tag = 'scoped memory for tpu_custom_call.1']
    #allocation4 [shape = 's32[1]{0}', space=sflag, size = 0x4, scoped, tag = 'scoped memory for tpu_custom_call.1']
    #allocation5 [shape = 'u8[8192]{0}', space=vmem, size = 0x2000, scoped, tag = 'output window, operand 0, single buffered']
    %8 = vsyncpa [#allocation3], 0
    %9 = vsyncpa [#allocation4], 0
    // Predicated region
    $region2: #{tpu_custom_call.1} parent=1 // pred_check
      _
    $region3: #{tpu_custom_call.1} parent=1 // pred_check_branch
      %11 = sbr.rel (0) target = $region5
    $region4: #{tpu_custom_call.1} parent=1 // pred_region
      %s13 = ssub.s32 256, 256
      %14 = vsyncadd [#allocation3], %s13
      %s15 = sshll.u32 [#allocation2], 4
      %s16 = int_to_ptr.vmem [resolvable:$true] %s15
      %21 = dma.hbm_to_vmem [thread:$0]  %s0, 256, %s16, [#allocation3], 128, 128, 8
    $region5: #{tpu_custom_call.1} parent=1 // pred_fallthru
      _
    // Predicated region
    $region6: #{tpu_custom_call.1} parent=1 // pred_check
      _
    $region7: #{tpu_custom_call.1} parent=1 // pred_check_branch
      %23 = sbr.rel (0) target = $region9
    $region8: #{tpu_custom_call.1} parent=1 // pred_region
      _
    $region9: #{tpu_custom_call.1} parent=1 // pred_fallthru
      _
    // Predicated region
    $region10: #{tpu_custom_call.1} parent=1 // pred_check
      _
    $region11: #{tpu_custom_call.1} parent=1 // pred_check_branch
      %25 = sbr.rel (0) target = $region13
    $region12: #{tpu_custom_call.1} parent=1 // pred_region
      _
    $region13: #{tpu_custom_call.1} parent=1 // pred_fallthru
      _
    // Predicated region
    $region14: #{tpu_custom_call.1} parent=1 // pred_check
      _
    $region15: #{tpu_custom_call.1} parent=1 // pred_check_branch
      %27 = sbr.rel (0) target = $region17
    $region16: #{tpu_custom_call.1} parent=1 // pred_region
      %28 = dma.done [#allocation3], 256
    $region17: #{tpu_custom_call.1} parent=1 // pred_fallthru
      _
    %v29 = vld [vmem:[#allocation2] sm:$0xff]
    %v30 = vld [vmem:[#allocation2 + $0x8] sm:$0xff]
    %v33 = vcombine.high %v29, %v29
    %v34 = vcombine.high %v30, %v30
    %vm37 = vcmask 1043456
    %v38 = vsel %vm37, %v29, 0.0
    %v39 = vrot.slane %v38, 4
    %v40 = vadd.f32 %v38, %v39
    %v41 = vrot.slane %v40, 2
    %v42 = vadd.f32 %v40, %v41
    %v43 = vrot.slane %v42, 1
    %v44 = vadd.f32 %v42, %v43
    %v45 = vsel %vm37, %v33, 0.0
    %v46 = vrot.slane %v45, 4
    %v47 = vadd.f32 %v45, %v46
    %v48 = vrot.slane %v47, 2
    %v49 = vadd.f32 %v47, %v48
    %v50 = vrot.slane %v49, 1
    %v51 = vadd.f32 %v49, %v50
    %v52 = vsel %vm37, %v30, 0.0
    %v53 = vrot.slane %v52, 4
    %v54 = vadd.f32 %v52, %v53
    %v55 = vrot.slane %v54, 2
    %v56 = vadd.f32 %v54, %v55
    %v57 = vrot.slane %v56, 1
    %v58 = vadd.f32 %v56, %v57
    %v59 = vsel %vm37, %v34, 0.0
    %v60 = vrot.slane %v59, 4
    %v61 = vadd.f32 %v59, %v60
    %v62 = vrot.slane %v61, 2
    %v63 = vadd.f32 %v61, %v62
    %v64 = vrot.slane %v63, 1
    %v65 = vadd.f32 %v63, %v64
    %v66 = vrcp.pop 4.0
    %v67 = vmul.f32 %v44, %v66
    %v68 = vmul.f32 %v51, %v66
    %v69 = vmul.f32 %v58, %v66
    %v70 = vmul.f32 %v65, %v66
    %v75 = vcombine.low %v67, %v68
    %v76 = vcombine.low %v69, %v70
    %v79 = vsub.f32 %v29, %v75
    %v80 = vsub.f32 %v30, %v76
    %v81 = vmul.f32 %v79, %v79
    %v82 = vmul.f32 %v80, %v80
    %v85 = vcombine.high %v81, %v81
    %v86 = vcombine.high %v82, %v82
    %v89 = vsel %vm37, %v81, 0.0
    %v90 = vrot.slane %v89, 4
    %v91 = vadd.f32 %v89, %v90
    %v92 = vrot.slane %v91, 2
    %v93 = vadd.f32 %v91, %v92
    %v94 = vrot.slane %v93, 1
    %v95 = vadd.f32 %v93, %v94
    %v96 = vsel %vm37, %v85, 0.0
    %v97 = vrot.slane %v96, 4
    %v98 = vadd.f32 %v96, %v97
    %v99 = vrot.slane %v98, 2
    %v100 = vadd.f32 %v98, %v99
    %v101 = vrot.slane %v100, 1
    %v102 = vadd.f32 %v100, %v101
    %v103 = vsel %vm37, %v82, 0.0
    %v104 = vrot.slane %v103, 4
    %v105 = vadd.f32 %v103, %v104
    %v106 = vrot.slane %v105, 2
    %v107 = vadd.f32 %v105, %v106
    %v108 = vrot.slane %v107, 1
    %v109 = vadd.f32 %v107, %v108
    %v110 = vsel %vm37, %v86, 0.0
    %v111 = vrot.slane %v110, 4
    %v112 = vadd.f32 %v110, %v111
    %v113 = vrot.slane %v112, 2
    %v114 = vadd.f32 %v112, %v113
    %v115 = vrot.slane %v114, 1
    %v116 = vadd.f32 %v114, %v115
    %v117 = vmul.f32 %v95, %v66
    %v118 = vmul.f32 %v102, %v66
    %v119 = vmul.f32 %v109, %v66
    %v120 = vmul.f32 %v116, %v66
    %v121 = vadd.f32 %v117, 1e-06
    %v122 = vadd.f32 %v118, 1e-06
    %v123 = vadd.f32 %v119, 1e-06
    %v124 = vadd.f32 %v120, 1e-06
    %v125 = vrsqrt.pop %v121
    %v126 = vrsqrt.pop %v122
    %v127 = vrsqrt.pop %v123
    %v128 = vrsqrt.pop %v124
    %v129 = vld [vmem:[%s1] sm:$0xf]
    %v130 = vld [vmem:[%s2] sm:$0xf]
    %v135 = vcombine.low %v125, %v126
    %v136 = vcombine.low %v127, %v128
    %v139 = vmul.f32 %v79, %v135
    %v140 = vmul.f32 %v80, %v136
    %142 = vset.pattern.permute.xlu0 0
    %143 = vperm.xlu0 %142, %v129
    %v144 = vpop.permute.xlu0 %143
    %v146 = vunpack.c.l.s4 839922192
    %v147 = vunpack.c.0.s8 %v146
    %v148 = vlaneseq
    %v149 = vshrl.u32 %v148, 7
    %v150 = vsub.s32 %v147, %v149
    %v151 = vrot.slane %v144, %v150
    %v153 = vmul.f32 %v139, %v151
    %v154 = vmul.f32 %v140, %v151
    %156 = vset.pattern.permute.xlu0 0
    %157 = vperm.xlu0 %156, %v130
    %v158 = vpop.permute.xlu0 %157
    %v160 = vunpack.c.l.s4 839922192
    %v161 = vunpack.c.0.s8 %v160
    %v162 = vlaneseq
    %v163 = vshrl.u32 %v162, 7
    %v164 = vsub.s32 %v161, %v163
    %v165 = vrot.slane %v158, %v164
    %v167 = vadd.f32 %v153, %v165
    %v168 = vadd.f32 %v154, %v165
    %169 = vst [vmem:[#allocation5] sm:$0xff] %v167
    %170 = vst [vmem:[#allocation5 + $0x8] sm:$0xff] %v168
    // Predicated region
    $region18: #{tpu_custom_call.1} parent=1 // pred_check
      _
    $region19: #{tpu_custom_call.1} parent=1 // pred_check_branch
      %172 = sbr.rel (0) target = $region21
    $region20: #{tpu_custom_call.1} parent=1 // pred_region
      %s174 = ssub.s32 256, 256
      %175 = vsyncadd [#allocation4], %s174
      %s176 = sshll.u32 [#allocation5], 4
      %s177 = int_to_ptr.vmem [resolvable:$true] %s176
      %182 = dma.vmem_to_hbm [thread:$0]  %s177, 256, %s3, [#allocation4], 128, 128, 8
    $region21: #{tpu_custom_call.1} parent=1 // pred_fallthru
      _
    // Predicated region
    $region22: #{tpu_custom_call.1} parent=1 // pred_check
      _
    $region23: #{tpu_custom_call.1} parent=1 // pred_check_branch
      %184 = sbr.rel (0) target = $region25
    $region24: #{tpu_custom_call.1} parent=1 // pred_region
      %185 = dma.done [#allocation4], 256
    $region25: #{tpu_custom_call.1} parent=1 // pred_fallthru
      _
    %186 = vsyncpa [#allocation3], 1
    %187 = vsyncpa [#allocation4], 1

</llo_original>
